<compile_context>
chip_gen: v7x
topology: tpu7x:2x2x1
jax: 0.10.0
libtpu: 0.0.40
codegen_flags: <defaults>
</compile_context>

<pallas_src>
import math

import jax
import jax.numpy as jnp
from jax import lax
from jax.experimental import pallas as pl
from jax.experimental.pallas import tpu as pltpu

LRELU_SLOPE = 0.2
INV_SQRT2 = 1.0 / math.sqrt(2.0)


# ------------------------------ fused kernel --------------------------------


def _fused_residual_coordconv_kernel(x_ref, w1_ref, bm1_ref, w2_ref, bm2_ref,
                                     pj_ref, pjb_ref, o_ref):
    """Fused CoordConv->LReLU->CoordConv->LReLU->(+proj)/sqrt(2).

    x_ref  : (1, H, W*Cin)        bf16  input slab (W and C folded into lanes)
    w1_ref : (3, W*Cin,  W*Cout)  bf16  banded conv1 weights, one band per dy
    bm1_ref: (H, W*Cout)          f32   conv1 coord-channel contribution + bias
    w2_ref : (3, W*Cout, W*Cout)  bf16  banded conv2 weights
    bm2_ref: (H, W*Cout)          f32   conv2 coord-channel contribution + bias
    pj_ref : (W*Cin, W*Cout)      bf16  block-diagonal 1x1 projection weights
    pjb_ref: (1, W*Cout)          f32   projection bias (tiled over W)
    o_ref  : (1, H, W*Cout)       f32   output slab (lane-dense store)
    """
    f32 = jnp.float32
    H = x_ref.shape[1]
    x = x_ref[0]                                        # (H, W*Cin) bf16

    # (H, H) row-shift matrices: encode the dy = 0 / dy = 2 taps of the 3x3
    # kernel together with the H-axis zero padding (row -1 / row H are zero).
    r = lax.broadcasted_iota(jnp.int32, (H, H), 0)
    c = lax.broadcasted_iota(jnp.int32, (H, H), 1)
    shift_dn = (r == c + 1).astype(f32)                 # out[h] = in[h-1]
    shift_up = (c == r + 1).astype(f32)                 # out[h] = in[h+1]

    def conv3x3_lrelu(inp_bf16, w_ref, bm_ref):
        # Three banded matmuls, one per kernel row; W padding lives in the band.
        p0 = jnp.dot(inp_bf16, w_ref[0], preferred_element_type=f32)
        p1 = jnp.dot(inp_bf16, w_ref[1], preferred_element_type=f32)
        p2 = jnp.dot(inp_bf16, w_ref[2], preferred_element_type=f32)
        acc = (p1 + bm_ref[...]
               + jnp.dot(shift_dn, p0, preferred_element_type=f32)
               + jnp.dot(shift_up, p2, preferred_element_type=f32))
        return jnp.where(acc >= 0, acc, LRELU_SLOPE * acc)      # LeakyReLU(0.2)

    h = conv3x3_lrelu(x, w1_ref, bm1_ref)                        # (H, W*Cout)
    h = conv3x3_lrelu(h.astype(jnp.bfloat16), w2_ref, bm2_ref)   # (H, W*Cout)

    proj = jnp.dot(x, pj_ref[...], preferred_element_type=f32) + pjb_ref[...]
    out = (h + proj) * INV_SQRT2
    o_ref[...] = out.reshape(o_ref.shape).astype(o_ref.dtype)


# --------------------- parameter preparation (runs once) --------------------


def _coord_channels(H, W):
    """AddCoords(with_r=False) channels, semantics copied from PyTorch ref.

    xx varies with the last spatial dim (W) but is normalized by (H - 1); yy
    varies with H but is normalized by (W - 1) -- reproduced as-is (identical
    for square inputs).  Channel order after concat: [x, xx, yy].
    """
    jj = lax.broadcasted_iota(jnp.float32, (1, H, W, 1), 2)    # column index
    ii = lax.broadcasted_iota(jnp.float32, (1, H, W, 1), 1)    # row index
    xx = (jj / (H - 1)) * 2.0 - 1.0
    yy = (ii / (W - 1)) * 2.0 - 1.0
    return jnp.concatenate([xx, yy], axis=-1)                  # (1, H, W, 2)


def _band_weights(w_hwio, W):
    """(3,3,Ci,Co) HWIO -> (3, W*Ci, W*Co) banded matrices (one per dy).

    For band dy:  out[h, wo, co] += sum_{wi,ci} x[h+dy-1, wi, ci] *
                                    B[dy, wi*Ci+ci, wo*Co+co]
    with B zero outside |wi - wo| <= 1 (this encodes the W zero-padding).
    """
    kh, kw, Ci, Co = w_hwio.shape
    wi = jnp.arange(W)[:, None]
    wo = jnp.arange(W)[None, :]
    dx = wi - wo + 1                                        # (W, W)
    valid = ((dx >= 0) & (dx < kw)).astype(w_hwio.dtype)
    dxc = jnp.clip(dx, 0, kw - 1)
    wsel = w_hwio[:, dxc, :, :]                             # (3, W, W, Ci, Co)
    wsel = wsel * valid[None, :, :, None, None]
    band = jnp.transpose(wsel, (0, 1, 3, 2, 4))             # (3, W, Ci, W, Co)
    return band.reshape(kh, W * Ci, W * Co)


def _coord_bias_map(w_coord, b, H, W):
    """Conv contribution of the (input-independent) coord channels + bias."""
    coords = _coord_channels(H, W)                          # (1, H, W, 2)
    cb = lax.conv_general_dilated(
        coords, w_coord, (1, 1), "SAME",
        dimension_numbers=("NHWC", "HWIO", "NHWC"),
        precision=lax.Precision.HIGHEST)                    # (1, H, W, Cout)
    Cout = w_coord.shape[-1]
    return (cb[0] + b).reshape(H, W * Cout).astype(jnp.float32)


def prepare_kernel_params(params, H, W):
    """Precompute kernel-ready weights (done once per parameter set / size)."""
    w1, b1 = params["w1"], params["b1"]   # (3,3,Cin+2,Cout), (Cout,)
    w2, b2 = params["w2"], params["b2"]   # (3,3,Cout+2,Cout), (Cout,)
    pw, pb = params["pw"], params["pb"]   # (Cin,Cout), (Cout,)
    Cin = w1.shape[2] - 2
    Cout = w1.shape[3]

    band1 = _band_weights(w1[:, :, :Cin, :], W).astype(jnp.bfloat16)
    band2 = _band_weights(w2[:, :, :Cout, :], W).astype(jnp.bfloat16)
    bm1 = _coord_bias_map(w1[:, :, Cin:, :], b1, H, W)
    bm2 = _coord_bias_map(w2[:, :, Cout:, :], b2, H, W)

    eye_w = jnp.eye(W, dtype=pw.dtype)
    pjmat = jnp.einsum("wv,io->wivo", eye_w, pw)
    pjmat = pjmat.reshape(W * Cin, W * Cout).astype(jnp.bfloat16)
    pjb = jnp.tile(pb, W).reshape(1, W * Cout).astype(jnp.float32)

    return dict(band1=band1, bm1=bm1, band2=band2, bm2=bm2,
                pjmat=pjmat, pjb=pjb)


# ------------------------------ public wrapper -------------------------------


def residual_coord_conv(x_nchw, kp):
    """ResidualCoordConv.forward (downsample=False, in_c != out_c -> proj)."""
    B, Cin, H, W = x_nchw.shape
    Cout = kp["pjb"].shape[-1] // W

    x = jnp.transpose(x_nchw, (0, 2, 3, 1))                    # NCHW -> NHWC
    x_slab = x.reshape(B, H, W * Cin).astype(jnp.bfloat16)     # fold W,C -> lanes

    out_slab = pl.pallas_call(
        _fused_residual_coordconv_kernel,
        grid=(B,),
        in_specs=[
            pl.BlockSpec((1, H, W * Cin), lambda b: (b, 0, 0)),
            pl.BlockSpec((3, W * Cin, W * Cout), lambda b: (0, 0, 0)),
            pl.BlockSpec((H, W * Cout), lambda b: (0, 0)),
            pl.BlockSpec((3, W * Cout, W * Cout), lambda b: (0, 0, 0)),
            pl.BlockSpec((H, W * Cout), lambda b: (0, 0)),
            pl.BlockSpec((W * Cin, W * Cout), lambda b: (0, 0)),
            pl.BlockSpec((1, W * Cout), lambda b: (0, 0)),
        ],
        out_specs=pl.BlockSpec((1, H, W * Cout), lambda b: (b, 0, 0)),
        out_shape=jax.ShapeDtypeStruct((B, H, W * Cout), jnp.float32),
        compiler_params=pltpu.CompilerParams(
            dimension_semantics=("parallel",),
            vmem_limit_bytes=32 * 1024 * 1024),
    )(x_slab, kp["band1"], kp["bm1"], kp["band2"], kp["bm2"],
      kp["pjmat"], kp["pjb"])

    out = out_slab.reshape(B, H, W, Cout)
    return jnp.transpose(out, (0, 3, 1, 2))                    # NHWC -> NCHW


# ------------------------ init + pure-JAX reference --------------------------


def init_params(key, in_c, out_c, k=3):
    """Deterministic PyTorch-style (kaiming-uniform-ish) init. HWIO weights."""
    keys = jax.random.split(key, 6)

    def conv_init(kw, kb, cin, cout, ksz):
        bound = 1.0 / math.sqrt(cin * ksz * ksz)
        w = jax.random.uniform(kw, (ksz, ksz, cin, cout), jnp.float32, -bound, bound)
        b = jax.random.uniform(kb, (cout,), jnp.float32, -bound, bound)
        return w, b

    w1, b1 = conv_init(keys[0], keys[1], in_c + 2, out_c, k)
    w2, b2 = conv_init(keys[2], keys[3], out_c + 2, out_c, k)
    bound = 1.0 / math.sqrt(in_c)
    pw = jax.random.uniform(keys[4], (in_c, out_c), jnp.float32, -bound, bound)
    pb = jax.random.uniform(keys[5], (out_c,), jnp.float32, -bound, bound)
    return dict(w1=w1, b1=b1, w2=w2, b2=b2, pw=pw, pb=pb)


def _add_coords_nhwc(x):
    B, H, W, _ = x.shape
    c = jnp.broadcast_to(_coord_channels(H, W), (B, H, W, 2))
    return jnp.concatenate([x, c], axis=-1)


def _ref_forward(x_nchw, params):
    """Pure-JAX f32 reference of ResidualCoordConv.forward."""
    x = jnp.transpose(x_nchw, (0, 2, 3, 1)).astype(jnp.float32)

    def conv(h, w, b):
        out = lax.conv_general_dilated(
            h, w, (1, 1), "SAME",
            dimension_numbers=("NHWC", "HWIO", "NHWC"),
            precision=lax.Precision.HIGHEST)
        out = out + b
        return jnp.where(out >= 0, out, LRELU_SLOPE * out)

    h = conv(_add_coords_nhwc(x), params["w1"], params["b1"])
    h = conv(_add_coords_nhwc(h), params["w2"], params["b2"])
    proj = jnp.einsum("bhwc,co->bhwo", x, params["pw"],
                      precision=lax.Precision.HIGHEST) + params["pb"]
    y = (h + proj) * INV_SQRT2
    return jnp.transpose(y, (0, 3, 1, 2))


if __name__ == "__main__":
    key = jax.random.PRNGKey(0)
    kx, kparam = jax.random.split(key)

    B, in_c, out_c, H, W = 2, 4, 8, 16, 16
    x = jax.random.normal(kx, (B, in_c, H, W), jnp.float32)    # NCHW like PyTorch
    params = init_params(kparam, in_c, out_c)
    kernel_params = prepare_kernel_params(params, H, W)

    out = jax.jit(residual_coord_conv)(x, kernel_params)
    out = jax.block_until_ready(out)

    ref = _ref_forward(x, params)
    assert out.shape == (B, out_c, H, W), out.shape
    # Kernel uses bf16 MXU operands with f32 accumulation -> tolerance is looser
    # than a pure-f32 comparison; structural bugs produce O(0.1-1) errors.
    max_err = float(jnp.max(jnp.abs(out - ref)))
    assert jnp.allclose(out, ref, atol=3e-2, rtol=3e-2), max_err

    print("KERNEL_OK")
</pallas_src>

<mosaic_0001>
module attributes {stable_mosaic.version = 11 : i64} {
  func.func @_fused_residual_coordconv_kernel(%arg0: i32, %arg1: memref<1x16x64xbf16, #tpu.memory_space<vmem>>, %arg2: memref<3x64x128xbf16, #tpu.memory_space<vmem>>, %arg3: memref<16x128xf32, #tpu.memory_space<vmem>>, %arg4: memref<3x128x128xbf16, #tpu.memory_space<vmem>>, %arg5: memref<16x128xf32, #tpu.memory_space<vmem>>, %arg6: memref<64x128xbf16, #tpu.memory_space<vmem>>, %arg7: memref<1x128xf32, #tpu.memory_space<vmem>>, %arg8: memref<1x16x128xf32, #tpu.memory_space<vmem>>) attributes {dimension_semantics = [#tpu.dimension_semantics<parallel>], iteration_bounds = array<i64: 2>, scalar_prefetch = 0 : i64, scratch_operands = 0 : i64, tpu.core_type = #tpu.core_type<tc>, window_params = [{transform_indices = @transform_0, window_bounds = array<i64: 1, 16, 64>}, {pipeline_mode = #tpu.pipeline_mode<synchronous>, transform_indices = @transform_1, window_bounds = array<i64: 3, 64, 128>}, {pipeline_mode = #tpu.pipeline_mode<synchronous>, transform_indices = @transform_2, window_bounds = array<i64: 16, 128>}, {pipeline_mode = #tpu.pipeline_mode<synchronous>, transform_indices = @transform_3, window_bounds = array<i64: 3, 128, 128>}, {pipeline_mode = #tpu.pipeline_mode<synchronous>, transform_indices = @transform_4, window_bounds = array<i64: 16, 128>}, {pipeline_mode = #tpu.pipeline_mode<synchronous>, transform_indices = @transform_5, window_bounds = array<i64: 64, 128>}, {pipeline_mode = #tpu.pipeline_mode<synchronous>, transform_indices = @transform_6, window_bounds = array<i64: 1, 128>}, {transform_indices = @transform_7, window_bounds = array<i64: 1, 16, 128>}]} {
    %c0 = arith.constant 0 : index
    %c0_0 = arith.constant 0 : index
    %c0_1 = arith.constant 0 : index
    %0 = vector.load %arg1[%c0, %c0_0, %c0_1] : memref<1x16x64xbf16, #tpu.memory_space<vmem>>, vector<1x16x64xbf16>
    %1 = vector.shape_cast %0 : vector<1x16x64xbf16> to vector<16x64xbf16>
    %2 = tpu.iota {dimensions = array<i32: 0>} : vector<16x16xi32>
    %3 = tpu.iota {dimensions = array<i32: 1>} : vector<16x16xi32>
    %c1_i32 = arith.constant 1 : i32
    %4 = vector.broadcast %c1_i32 : i32 to vector<16x16xi32>
    %5 = arith.addi %3, %4 : vector<16x16xi32>
    %6 = arith.cmpi eq, %2, %5 : vector<16x16xi32>
    %7 = arith.extui %6 : vector<16x16xi1> to vector<16x16xi32>
    %8 = arith.sitofp %7 : vector<16x16xi32> to vector<16x16xf32>
    %c1_i32_2 = arith.constant 1 : i32
    %9 = vector.broadcast %c1_i32_2 : i32 to vector<16x16xi32>
    %10 = arith.addi %2, %9 : vector<16x16xi32>
    %11 = arith.cmpi eq, %3, %10 : vector<16x16xi32>
    %12 = arith.extui %11 : vector<16x16xi1> to vector<16x16xi32>
    %13 = arith.sitofp %12 : vector<16x16xi32> to vector<16x16xf32>
    %c0_3 = arith.constant 0 : index
    %c0_4 = arith.constant 0 : index
    %c0_5 = arith.constant 0 : index
    %14 = vector.load %arg2[%c0_3, %c0_4, %c0_5] : memref<3x64x128xbf16, #tpu.memory_space<vmem>>, vector<1x64x128xbf16>
    %15 = vector.shape_cast %14 : vector<1x64x128xbf16> to vector<64x128xbf16>
    %cst = arith.constant dense<0.000000e+00> : vector<16x128xf32>
    %16 = tpu.matmul %1, %15, %cst {dimension_numbers = #tpu.dot_dimension_numbers<[1], [0], [0], [1], [0, 0, 1, 1], [], []>} : vector<16x64xbf16>, vector<64x128xbf16>, vector<16x128xf32> -> vector<16x128xf32>
    %c1 = arith.constant 1 : index
    %c0_6 = arith.constant 0 : index
    %c0_7 = arith.constant 0 : index
    %17 = vector.load %arg2[%c1, %c0_6, %c0_7] : memref<3x64x128xbf16, #tpu.memory_space<vmem>>, vector<1x64x128xbf16>
    %18 = vector.shape_cast %17 : vector<1x64x128xbf16> to vector<64x128xbf16>
    %cst_8 = arith.constant dense<0.000000e+00> : vector<16x128xf32>
    %19 = tpu.matmul %1, %18, %cst_8 {dimension_numbers = #tpu.dot_dimension_numbers<[1], [0], [0], [1], [0, 0, 1, 1], [], []>} : vector<16x64xbf16>, vector<64x128xbf16>, vector<16x128xf32> -> vector<16x128xf32>
    %c2 = arith.constant 2 : index
    %c0_9 = arith.constant 0 : index
    %c0_10 = arith.constant 0 : index
    %20 = vector.load %arg2[%c2, %c0_9, %c0_10] : memref<3x64x128xbf16, #tpu.memory_space<vmem>>, vector<1x64x128xbf16>
    %21 = vector.shape_cast %20 : vector<1x64x128xbf16> to vector<64x128xbf16>
    %cst_11 = arith.constant dense<0.000000e+00> : vector<16x128xf32>
    %22 = tpu.matmul %1, %21, %cst_11 {dimension_numbers = #tpu.dot_dimension_numbers<[1], [0], [0], [1], [0, 0, 1, 1], [], []>} : vector<16x64xbf16>, vector<64x128xbf16>, vector<16x128xf32> -> vector<16x128xf32>
    %c0_12 = arith.constant 0 : index
    %c0_13 = arith.constant 0 : index
    %23 = vector.load %arg3[%c0_12, %c0_13] : memref<16x128xf32, #tpu.memory_space<vmem>>, vector<16x128xf32>
    %24 = arith.addf %19, %23 : vector<16x128xf32>
    %cst_14 = arith.constant dense<0.000000e+00> : vector<16x128xf32>
    %25 = tpu.matmul %8, %16, %cst_14 {dimension_numbers = #tpu.dot_dimension_numbers<[1], [0], [0], [1], [0, 0, 1, 1], [], []>} : vector<16x16xf32>, vector<16x128xf32>, vector<16x128xf32> -> vector<16x128xf32>
    %26 = arith.addf %24, %25 : vector<16x128xf32>
    %cst_15 = arith.constant dense<0.000000e+00> : vector<16x128xf32>
    %27 = tpu.matmul %13, %22, %cst_15 {dimension_numbers = #tpu.dot_dimension_numbers<[1], [0], [0], [1], [0, 0, 1, 1], [], []>} : vector<16x16xf32>, vector<16x128xf32>, vector<16x128xf32> -> vector<16x128xf32>
    %28 = arith.addf %26, %27 : vector<16x128xf32>
    %cst_16 = arith.constant 0.000000e+00 : f32
    %29 = vector.broadcast %cst_16 : f32 to vector<16x128xf32>
    %30 = arith.cmpf oge, %28, %29 : vector<16x128xf32>
    %cst_17 = arith.constant 2.000000e-01 : f32
    %31 = vector.broadcast %cst_17 : f32 to vector<16x128xf32>
    %32 = arith.mulf %31, %28 : vector<16x128xf32>
    %33 = arith.select %30, %28, %32 : vector<16x128xi1>, vector<16x128xf32>
    %34 = arith.truncf %33 : vector<16x128xf32> to vector<16x128xbf16>
    %c0_18 = arith.constant 0 : index
    %c0_19 = arith.constant 0 : index
    %c0_20 = arith.constant 0 : index
    %35 = vector.load %arg4[%c0_18, %c0_19, %c0_20] : memref<3x128x128xbf16, #tpu.memory_space<vmem>>, vector<1x128x128xbf16>
    %36 = vector.shape_cast %35 : vector<1x128x128xbf16> to vector<128x128xbf16>
    %cst_21 = arith.constant dense<0.000000e+00> : vector<16x128xf32>
    %37 = tpu.matmul %34, %36, %cst_21 {dimension_numbers = #tpu.dot_dimension_numbers<[1], [0], [0], [1], [0, 0, 1, 1], [], []>} : vector<16x128xbf16>, vector<128x128xbf16>, vector<16x128xf32> -> vector<16x128xf32>
    %c1_22 = arith.constant 1 : index
    %c0_23 = arith.constant 0 : index
    %c0_24 = arith.constant 0 : index
    %38 = vector.load %arg4[%c1_22, %c0_23, %c0_24] : memref<3x128x128xbf16, #tpu.memory_space<vmem>>, vector<1x128x128xbf16>
    %39 = vector.shape_cast %38 : vector<1x128x128xbf16> to vector<128x128xbf16>
    %cst_25 = arith.constant dense<0.000000e+00> : vector<16x128xf32>
    %40 = tpu.matmul %34, %39, %cst_25 {dimension_numbers = #tpu.dot_dimension_numbers<[1], [0], [0], [1], [0, 0, 1, 1], [], []>} : vector<16x128xbf16>, vector<128x128xbf16>, vector<16x128xf32> -> vector<16x128xf32>
    %c2_26 = arith.constant 2 : index
    %c0_27 = arith.constant 0 : index
    %c0_28 = arith.constant 0 : index
    %41 = vector.load %arg4[%c2_26, %c0_27, %c0_28] : memref<3x128x128xbf16, #tpu.memory_space<vmem>>, vector<1x128x128xbf16>
    %42 = vector.shape_cast %41 : vector<1x128x128xbf16> to vector<128x128xbf16>
    %cst_29 = arith.constant dense<0.000000e+00> : vector<16x128xf32>
    %43 = tpu.matmul %34, %42, %cst_29 {dimension_numbers = #tpu.dot_dimension_numbers<[1], [0], [0], [1], [0, 0, 1, 1], [], []>} : vector<16x128xbf16>, vector<128x128xbf16>, vector<16x128xf32> -> vector<16x128xf32>
    %c0_30 = arith.constant 0 : index
    %c0_31 = arith.constant 0 : index
    %44 = vector.load %arg5[%c0_30, %c0_31] : memref<16x128xf32, #tpu.memory_space<vmem>>, vector<16x128xf32>
    %45 = arith.addf %40, %44 : vector<16x128xf32>
    %cst_32 = arith.constant dense<0.000000e+00> : vector<16x128xf32>
    %46 = tpu.matmul %8, %37, %cst_32 {dimension_numbers = #tpu.dot_dimension_numbers<[1], [0], [0], [1], [0, 0, 1, 1], [], []>} : vector<16x16xf32>, vector<16x128xf32>, vector<16x128xf32> -> vector<16x128xf32>
    %47 = arith.addf %45, %46 : vector<16x128xf32>
    %cst_33 = arith.constant dense<0.000000e+00> : vector<16x128xf32>
    %48 = tpu.matmul %13, %43, %cst_33 {dimension_numbers = #tpu.dot_dimension_numbers<[1], [0], [0], [1], [0, 0, 1, 1], [], []>} : vector<16x16xf32>, vector<16x128xf32>, vector<16x128xf32> -> vector<16x128xf32>
    %49 = arith.addf %47, %48 : vector<16x128xf32>
    %cst_34 = arith.constant 0.000000e+00 : f32
    %50 = vector.broadcast %cst_34 : f32 to vector<16x128xf32>
    %51 = arith.cmpf oge, %49, %50 : vector<16x128xf32>
    %cst_35 = arith.constant 2.000000e-01 : f32
    %52 = vector.broadcast %cst_35 : f32 to vector<16x128xf32>
    %53 = arith.mulf %52, %49 : vector<16x128xf32>
    %54 = arith.select %51, %49, %53 : vector<16x128xi1>, vector<16x128xf32>
    %c0_36 = arith.constant 0 : index
    %c0_37 = arith.constant 0 : index
    %55 = vector.load %arg6[%c0_36, %c0_37] : memref<64x128xbf16, #tpu.memory_space<vmem>>, vector<64x128xbf16>
    %cst_38 = arith.constant dense<0.000000e+00> : vector<16x128xf32>
    %56 = tpu.matmul %1, %55, %cst_38 {dimension_numbers = #tpu.dot_dimension_numbers<[1], [0], [0], [1], [0, 0, 1, 1], [], []>} : vector<16x64xbf16>, vector<64x128xbf16>, vector<16x128xf32> -> vector<16x128xf32>
    %c0_39 = arith.constant 0 : index
    %c0_40 = arith.constant 0 : index
    %57 = vector.load %arg7[%c0_39, %c0_40] : memref<1x128xf32, #tpu.memory_space<vmem>>, vector<1x128xf32>
    %58 = vector.broadcast %57 : vector<1x128xf32> to vector<16x128xf32>
    %59 = arith.addf %56, %58 : vector<16x128xf32>
    %60 = arith.addf %54, %59 : vector<16x128xf32>
    %cst_41 = arith.constant 0.707106769 : f32
    %61 = vector.broadcast %cst_41 : f32 to vector<16x128xf32>
    %62 = arith.mulf %60, %61 : vector<16x128xf32>
    %63 = vector.shape_cast %62 : vector<16x128xf32> to vector<1x16x128xf32>
    %c0_42 = arith.constant 0 : index
    %c0_43 = arith.constant 0 : index
    %c0_44 = arith.constant 0 : index
    %64 = vector.load %arg8[%c0_42, %c0_43, %c0_44] : memref<1x16x128xf32, #tpu.memory_space<vmem>>, vector<1x16x128xf32>
    tpu.vector_store %arg8[%c0_42, %c0_43, %c0_44], %63 {strides = array<i32>} : memref<1x16x128xf32, #tpu.memory_space<vmem>>, vector<1x16x128xf32>,
    return
  }
  func.func @transform_0(%arg0: i32) -> (i32, i32, i32) {
    %c0_i32 = arith.constant 0 : i32
    %c0_i32_0 = arith.constant 0 : i32
    %c0_i32_1 = arith.constant 0 : i32
    return %arg0, %c0_i32, %c0_i32_0 : i32, i32, i32
  }
  func.func @transform_1(%arg0: i32) -> (i32, i32, i32) {
    %c0_i32 = arith.constant 0 : i32
    %c0_i32_0 = arith.constant 0 : i32
    %c0_i32_1 = arith.constant 0 : i32
    %c0_i32_2 = arith.constant 0 : i32
    return %c0_i32, %c0_i32_0, %c0_i32_1 : i32, i32, i32
  }
  func.func @transform_2(%arg0: i32) -> (i32, i32) {
    %c0_i32 = arith.constant 0 : i32
    %c0_i32_0 = arith.constant 0 : i32
    %c0_i32_1 = arith.constant 0 : i32
    return %c0_i32, %c0_i32_0 : i32, i32
  }
  func.func @transform_3(%arg0: i32) -> (i32, i32, i32) {
    %c0_i32 = arith.constant 0 : i32
    %c0_i32_0 = arith.constant 0 : i32
    %c0_i32_1 = arith.constant 0 : i32
    %c0_i32_2 = arith.constant 0 : i32
    return %c0_i32, %c0_i32_0, %c0_i32_1 : i32, i32, i32
  }
  func.func @transform_4(%arg0: i32) -> (i32, i32) {
    %c0_i32 = arith.constant 0 : i32
    %c0_i32_0 = arith.constant 0 : i32
    %c0_i32_1 = arith.constant 0 : i32
    return %c0_i32, %c0_i32_0 : i32, i32
  }
  func.func @transform_5(%arg0: i32) -> (i32, i32) {
    %c0_i32 = arith.constant 0 : i32
    %c0_i32_0 = arith.constant 0 : i32
    %c0_i32_1 = arith.constant 0 : i32
    return %c0_i32, %c0_i32_0 : i32, i32
  }
  func.func @transform_6(%arg0: i32) -> (i32, i32) {
    %c0_i32 = arith.constant 0 : i32
    %c0_i32_0 = arith.constant 0 : i32
    %c0_i32_1 = arith.constant 0 : i32
    return %c0_i32, %c0_i32_0 : i32, i32
  }
  func.func @transform_7(%arg0: i32) -> (i32, i32, i32) {
    %c0_i32 = arith.constant 0 : i32
    %c0_i32_0 = arith.constant 0 : i32
    %c0_i32_1 = arith.constant 0 : i32
    return %arg0, %c0_i32, %c0_i32_0 : i32, i32, i32
  }
}

</mosaic_0001>

<llo_original>
// kernel: residual_coord_conv.1
$region0: #{residual_coord_conv.1}
  #allocation0 [shape = 'u32[]', space=smem, size = 0x4, offset = 0x4, fixed_abs, tag = 'smem constant byte address 0x4 - core index']
  #allocation1 [shape = 'u32[144,128]{1,0:T(1,128)}', space=vmem, size = 0x12000, scoped, tag = 'internal scratch']
  %s0 = inlined_call_operand.vmem [shape: bf16[2,16,64], index: 0, kind: input, shape index: {}]
  %s1 = inlined_call_operand.vmem [shape: bf16[3,64,128], index: 1, kind: input, shape index: {}]
  %s2 = inlined_call_operand.vmem [shape: f32[16,128], index: 2, kind: input, shape index: {}]
  %s3 = inlined_call_operand.vmem [shape: bf16[3,128,128], index: 3, kind: input, shape index: {}]
  %s4 = inlined_call_operand.vmem [shape: f32[16,128], index: 4, kind: input, shape index: {}]
  %s5 = inlined_call_operand.vmem [shape: bf16[64,128], index: 5, kind: input, shape index: {}]
  %s6 = inlined_call_operand.vmem [shape: f32[1,128], index: 6, kind: input, shape index: {}]
  %s7 = inlined_call_operand.vmem [shape: f32[2,16,128], index: 7, kind: output, shape index: {}]
  %s8 = sld [smem:[#allocation0]]
  $region61: #{residual_coord_conv.1} parent=0
    _
  %s10 = ssub.s32 1, %s8
  %s11 = scalar_select 0, %s10, %s8
  loop: start=0, step=1, limit=4
  $region2: #{residual_coord_conv.1} parent=0 // loop_pre_header
    _
  $region3: #{residual_coord_conv.1} parent=0 // loop_header
    %s13 = sphi 0, %s17
    %p14 = scmp.ge.s32.totalorder %s13, 4
    %s23 = sphi 0, %s25
    %s26 = sphi 0, %s23
    %s27 = sphi 0, %s26
    %s43 = sphi 0, %s27
    %s47 = sphi 0, %s47
    %s49 = sphi 0, %s47
    %s50 = sphi 0, %s49
    %s64 = sphi 0, %s50
    %s68 = sphi 0, %s68
    %s70 = sphi 0, %s68
    %s71 = sphi 0, %s70
    %s85 = sphi 0, %s71
    %s89 = sphi 0, %s89
    %s91 = sphi 0, %s89
    %s92 = sphi 0, %s91
    %s106 = sphi 0, %s92
    %s110 = sphi 0, %s110
    %s112 = sphi 0, %s110
    %s113 = sphi 0, %s112
    %s127 = sphi 0, %s113
    %s131 = sphi 0, %s131
    %s133 = sphi 0, %s131
    %s134 = sphi 0, %s133
    %s148 = sphi 0, %s134
    %s152 = sphi 0, %s152
    %s154 = sphi 0, %s152
    %s155 = sphi 0, %s154
    %s169 = sphi 0, %s155
    %s175 = sphi 0, %s177
    %s178 = sphi 0, %s175
    %s179 = sphi 0, %s178
    %s195 = sphi 0, %s179
  $region4: #{residual_coord_conv.1} parent=0 // loop_header_branch
    %16 = sbr.rel (%p14) target = $region8
  $region5: #{residual_coord_conv.1} parent=0 // loop_body
    %s18 = ssub.s32 %s13, 1
    %s19 = ssub.s32 %s13, 2
    %s20 = sadd.s32 %s13, 1
    %s21 = ssub.s32 %s13, %s20
    %p22 = scmp.eq.s32.totalorder %s21, 0
    %s24 = sadd.s32 %s23, 1
    %s25 = scalar_select %p22, %s23, %s24
    %p28 = pneg %p22
    %p29 = scmp.eq.s32.totalorder %s13, 1
    %p30 = por %p28, %p29
    %p31 = scmp.ne.s32.totalorder %s23, %s26
    %p32 = scmp.eq.s32.totalorder %s13, 0
    %p33 = por %p31, %p32
    %p34 = scmp.ne.s32.totalorder %s23, %s26
    %p35 = scmp.eq.s32.totalorder %s18, 1
    %p36 = por %p34, %p35
    %p37 = scmp.ne.s32.totalorder %s26, %s27
    %p38 = scmp.eq.s32.totalorder %s18, 0
    %p39 = por %p37, %p38
    %p40 = scmp.ne.s32.totalorder %s26, %s27
    %p41 = scmp.eq.s32.totalorder %s19, 1
    %p42 = por %p40, %p41
    %p44 = scmp.ne.s32.totalorder %s27, %s43
    %p45 = scmp.eq.s32.totalorder %s19, 0
    %p46 = por %p44, %p45
    %s48 = sadd.s32 %s47, 1
    %p51 = scmp.eq.s32.totalorder %s13, 1
    %p52 = scmp.ne.s32.totalorder %s47, %s49
    %p53 = scmp.eq.s32.totalorder %s13, 0
    %p54 = por %p52, %p53
    %p55 = scmp.ne.s32.totalorder %s47, %s49
    %p56 = scmp.eq.s32.totalorder %s18, 1
    %p57 = por %p55, %p56
    %p58 = scmp.ne.s32.totalorder %s49, %s50
    %p59 = scmp.eq.s32.totalorder %s18, 0
    %p60 = por %p58, %p59
    %p61 = scmp.ne.s32.totalorder %s49, %s50
    %p62 = scmp.eq.s32.totalorder %s19, 1
    %p63 = por %p61, %p62
    %p65 = scmp.ne.s32.totalorder %s50, %s64
    %p66 = scmp.eq.s32.totalorder %s19, 0
    %p67 = por %p65, %p66
    %s69 = sadd.s32 %s68, 1
    %p72 = scmp.eq.s32.totalorder %s13, 1
    %p73 = scmp.ne.s32.totalorder %s68, %s70
    %p74 = scmp.eq.s32.totalorder %s13, 0
    %p75 = por %p73, %p74
    %p76 = scmp.ne.s32.totalorder %s68, %s70
    %p77 = scmp.eq.s32.totalorder %s18, 1
    %p78 = por %p76, %p77
    %p79 = scmp.ne.s32.totalorder %s70, %s71
    %p80 = scmp.eq.s32.totalorder %s18, 0
    %p81 = por %p79, %p80
    %p82 = scmp.ne.s32.totalorder %s70, %s71
    %p83 = scmp.eq.s32.totalorder %s19, 1
    %p84 = por %p82, %p83
    %p86 = scmp.ne.s32.totalorder %s71, %s85
    %p87 = scmp.eq.s32.totalorder %s19, 0
    %p88 = por %p86, %p87
    %s90 = sadd.s32 %s89, 1
    %p93 = scmp.eq.s32.totalorder %s13, 1
    %p94 = scmp.ne.s32.totalorder %s89, %s91
    %p95 = scmp.eq.s32.totalorder %s13, 0
    %p96 = por %p94, %p95
    %p97 = scmp.ne.s32.totalorder %s89, %s91
    %p98 = scmp.eq.s32.totalorder %s18, 1
    %p99 = por %p97, %p98
    %p100 = scmp.ne.s32.totalorder %s91, %s92
    %p101 = scmp.eq.s32.totalorder %s18, 0
    %p102 = por %p100, %p101
    %p103 = scmp.ne.s32.totalorder %s91, %s92
    %p104 = scmp.eq.s32.totalorder %s19, 1
    %p105 = por %p103, %p104
    %p107 = scmp.ne.s32.totalorder %s92, %s106
    %p108 = scmp.eq.s32.totalorder %s19, 0
    %p109 = por %p107, %p108
    %s111 = sadd.s32 %s110, 1
    %p114 = scmp.eq.s32.totalorder %s13, 1
    %p115 = scmp.ne.s32.totalorder %s110, %s112
    %p116 = scmp.eq.s32.totalorder %s13, 0
    %p117 = por %p115, %p116
    %p118 = scmp.ne.s32.totalorder %s110, %s112
    %p119 = scmp.eq.s32.totalorder %s18, 1
    %p120 = por %p118, %p119
    %p121 = scmp.ne.s32.totalorder %s112, %s113
    %p122 = scmp.eq.s32.totalorder %s18, 0
    %p123 = por %p121, %p122
    %p124 = scmp.ne.s32.totalorder %s112, %s113
    %p125 = scmp.eq.s32.totalorder %s19, 1
    %p126 = por %p124, %p125
    %p128 = scmp.ne.s32.totalorder %s113, %s127
    %p129 = scmp.eq.s32.totalorder %s19, 0
    %p130 = por %p128, %p129
    %s132 = sadd.s32 %s131, 1
    %p135 = scmp.eq.s32.totalorder %s13, 1
    %p136 = scmp.ne.s32.totalorder %s131, %s133
    %p137 = scmp.eq.s32.totalorder %s13, 0
    %p138 = por %p136, %p137
    %p139 = scmp.ne.s32.totalorder %s131, %s133
    %p140 = scmp.eq.s32.totalorder %s18, 1
    %p141 = por %p139, %p140
    %p142 = scmp.ne.s32.totalorder %s133, %s134
    %p143 = scmp.eq.s32.totalorder %s18, 0
    %p144 = por %p142, %p143
    %p145 = scmp.ne.s32.totalorder %s133, %s134
    %p146 = scmp.eq.s32.totalorder %s19, 1
    %p147 = por %p145, %p146
    %p149 = scmp.ne.s32.totalorder %s134, %s148
    %p150 = scmp.eq.s32.totalorder %s19, 0
    %p151 = por %p149, %p150
    %s153 = sadd.s32 %s152, 1
    %p156 = scmp.eq.s32.totalorder %s13, 1
    %p157 = scmp.ne.s32.totalorder %s152, %s154
    %p158 = scmp.eq.s32.totalorder %s13, 0
    %p159 = por %p157, %p158
    %p160 = scmp.ne.s32.totalorder %s152, %s154
    %p161 = scmp.eq.s32.totalorder %s18, 1
    %p162 = por %p160, %p161
    %p163 = scmp.ne.s32.totalorder %s154, %s155
    %p164 = scmp.eq.s32.totalorder %s18, 0
    %p165 = por %p163, %p164
    %p166 = scmp.ne.s32.totalorder %s154, %s155
    %p167 = scmp.eq.s32.totalorder %s19, 1
    %p168 = por %p166, %p167
    %p170 = scmp.ne.s32.totalorder %s155, %s169
    %p171 = scmp.eq.s32.totalorder %s19, 0
    %p172 = por %p170, %p171
    %s173 = ssub.s32 %s13, %s20
    %p174 = scmp.eq.s32.totalorder %s173, 0
    %s176 = sadd.s32 %s175, 1
    %s177 = scalar_select %p174, %s175, %s176
    %p180 = pneg %p174
    %p181 = scmp.eq.s32.totalorder %s13, 1
    %p182 = por %p180, %p181
    %p183 = scmp.ne.s32.totalorder %s175, %s178
    %p184 = scmp.eq.s32.totalorder %s13, 0
    %p185 = por %p183, %p184
    %p186 = scmp.ne.s32.totalorder %s175, %s178
    %p187 = scmp.eq.s32.totalorder %s18, 1
    %p188 = por %p186, %p187
    %p189 = scmp.ne.s32.totalorder %s178, %s179
    %p190 = scmp.eq.s32.totalorder %s18, 0
    %p191 = por %p189, %p190
    %p192 = scmp.ne.s32.totalorder %s178, %s179
    %p193 = scmp.eq.s32.totalorder %s19, 1
    %p194 = por %p192, %p193
    %p196 = scmp.ne.s32.totalorder %s179, %s195
    %p197 = scmp.eq.s32.totalorder %s19, 0
    %p198 = por %p196, %p197
    %p199 = scmp.le.s32.totalorder 1, %s13
    %p200 = scmp.lt.s32.totalorder %s13, 3
    %p201 = pnand %p199, %p200
    %p202 = pneg %p201
    // Predicated region
    $region9: #{residual_coord_conv.1} parent=5 // pred_check
      _
    $region10: #{residual_coord_conv.1} parent=5 // pred_check_branch
      %204 = sbr.rel (%p201) target = $region12
    $region11: #{residual_coord_conv.1} parent=5 // pred_region
      %s205 = ssub.s32 %s13, 1
      // Predicated region
      $region13: #{residual_coord_conv.1} parent=11 // pred_check
        %p206 = pneg %p60
      $region14: #{residual_coord_conv.1} parent=11 // pred_check_branch
        %208 = sbr.rel (%p206) target = $region16
      $region15: #{residual_coord_conv.1} parent=11 // pred_region
        _
      $region16: #{residual_coord_conv.1} parent=11 // pred_fallthru
        _
      // Predicated region
      $region17: #{residual_coord_conv.1} parent=11 // pred_check
        %p209 = pneg %p81
      $region18: #{residual_coord_conv.1} parent=11 // pred_check_branch
        %211 = sbr.rel (%p209) target = $region20
      $region19: #{residual_coord_conv.1} parent=11 // pred_region
        _
      $region20: #{residual_coord_conv.1} parent=11 // pred_fallthru
        _
      // Predicated region
      $region21: #{residual_coord_conv.1} parent=11 // pred_check
        %p212 = pneg %p102
      $region22: #{residual_coord_conv.1} parent=11 // pred_check_branch
        %214 = sbr.rel (%p212) target = $region24
      $region23: #{residual_coord_conv.1} parent=11 // pred_region
        _
      $region24: #{residual_coord_conv.1} parent=11 // pred_fallthru
        _
      // Predicated region
      $region25: #{residual_coord_conv.1} parent=11 // pred_check
        %p215 = pneg %p123
      $region26: #{residual_coord_conv.1} parent=11 // pred_check_branch
        %217 = sbr.rel (%p215) target = $region28
      $region27: #{residual_coord_conv.1} parent=11 // pred_region
        _
      $region28: #{residual_coord_conv.1} parent=11 // pred_fallthru
        _
      // Predicated region
      $region29: #{residual_coord_conv.1} parent=11 // pred_check
        %p218 = pneg %p144
      $region30: #{residual_coord_conv.1} parent=11 // pred_check_branch
        %220 = sbr.rel (%p218) target = $region32
      $region31: #{residual_coord_conv.1} parent=11 // pred_region
        _
      $region32: #{residual_coord_conv.1} parent=11 // pred_fallthru
        _
      // Predicated region
      $region33: #{residual_coord_conv.1} parent=11 // pred_check
        %p221 = pneg %p165
      $region34: #{residual_coord_conv.1} parent=11 // pred_check_branch
        %223 = sbr.rel (%p221) target = $region36
      $region35: #{residual_coord_conv.1} parent=11 // pred_region
        _
      $region36: #{residual_coord_conv.1} parent=11 // pred_fallthru
        _
    $region12: #{residual_coord_conv.1} parent=5 // pred_fallthru
      _
    %p224 = scmp.lt.s32.totalorder %s13, 2
    // Predicated region
    $region37: #{residual_coord_conv.1} parent=5 // pred_check
      %p225 = pneg %p224
    $region38: #{residual_coord_conv.1} parent=5 // pred_check_branch
      %227 = sbr.rel (%p225) target = $region40
    $region39: #{residual_coord_conv.1} parent=5 // pred_region
      // Predicated region
      $region41: #{residual_coord_conv.1} parent=39 // pred_check
        %p228 = pneg %p33
      $region42: #{residual_coord_conv.1} parent=39 // pred_check_branch
        %230 = sbr.rel (%p228) target = $region44
      $region43: #{residual_coord_conv.1} parent=39 // pred_region
        %p231 = scmp.lt.s32.totalorder %s13, 1
        %s232 = scalar_select %p231, %s13, 1
        %s233 = smul.addr %s232, 2
        %s234 = smul.addr %s233, 4
        %s235 = scalar_lea.vmem %s0, %s234
      $region44: #{residual_coord_conv.1} parent=39 // pred_fallthru
        _
    $region40: #{residual_coord_conv.1} parent=5 // pred_fallthru
      _
    %p236 = scmp.le.s32.totalorder 1, %s13
    %p237 = scmp.lt.s32.totalorder %s13, 3
    %p238 = pnand %p236, %p237
    %p239 = pneg %p238
    // Predicated region
    $region45: #{residual_coord_conv.1} parent=5 // pred_check
      _
    $region46: #{residual_coord_conv.1} parent=5 // pred_check_branch
      %241 = sbr.rel (%p238) target = $region48
    $region47: #{residual_coord_conv.1} parent=5 // pred_region
      %s242 = ssub.s32 %s13, 1
      %p243 = scmp.lt.s32.totalorder %s18, 1
      %s244 = scalar_select %p243, %s18, 1
      %s245 = smul.addr %s244, 2
      %s246 = smul.addr %s245, 4
      %s247 = scalar_lea.vmem %s0, %s246
      %p248 = pneg %p39
      %p249 = pneg %p36
      %p250 = pneg %p60
      %p251 = pneg %p57
      %p252 = pneg %p81
      %p253 = pneg %p78
      %p254 = pneg %p102
      %p255 = pneg %p99
      %p256 = pneg %p123
      %p257 = pneg %p120
      %p258 = pneg %p144
      %p259 = pneg %p141
      %p260 = pneg %p165
      %p261 = pneg %p162
      %p262 = pneg %p191
      %p263 = pneg %p188
      %p264 = scmp.lt.s32.totalorder %s18, 1
      %s265 = scalar_select %p264, %s18, 1
      %s266 = smul.addr %s265, 2
      %s267 = smul.addr %s266, 8
      %s268 = scalar_lea.vmem %s7, %s267
      %p269 = scmp.lt.s32.totalorder %s18, 1
      %s270 = scalar_select %p269, %s18, 1
      %s271 = smul.addr %s270, 2
      %s272 = smul.addr %s271, 4
      %s273 = scalar_lea.vmem %s0, %s272
      %p274 = scmp.lt.s32.totalorder %s18, 1
      %s275 = scalar_select %p274, %s18, 1
      %s276 = smul.addr %s275, 2
      %s277 = smul.addr %s276, 8
      %s278 = scalar_lea.vmem %s7, %s277
      %v280 = vld [vmem:[%s273] sm:$0xf]
      %v281 = vld [vmem:[%s273 + $0x4] sm:$0xf]
      %v282 = vlaneseq
      %v283 = vshrl.u32 %v282, 7
      %v284 = vadd.s32 %v283, 8
      %v285 = vlaneseq
      %v286 = vand.u32 %v285, 127
      %v287 = vadd.s32 %v286, 1
      %vm288 = vcmp.eq.s32.totalorder %v283, %v287
      %vm289 = vcmp.eq.s32.totalorder %v284, %v287
      %v290 = vsel %vm288, 1, 0
      %v291 = vsel %vm289, 1, 0
      %v292 = vcvt.s32.f32 %v290
      %v293 = vcvt.s32.f32 %v291
      %v294 = vadd.s32 %v283, 1
      %v295 = vadd.s32 %v284, 1
      %vm296 = vcmp.eq.s32.totalorder %v286, %v294
      %vm297 = vcmp.eq.s32.totalorder %v286, %v295
      %v298 = vsel %vm296, 1, 0
      %v299 = vsel %vm297, 1, 0
      %v300 = vcvt.s32.f32 %v298
      %v301 = vcvt.s32.f32 %v299
      %v302 = vld [vmem:[%s1] sm:$0xf]
      %v303 = vld [vmem:[%s1 + $0x4] sm:$0xf]
      %v304 = vld [vmem:[%s1 + $0x8] sm:$0xf]
      %v305 = vld [vmem:[%s1 + $0xc] sm:$0xf]
      %v306 = vld [vmem:[%s1 + $0x10] sm:$0xf]
      %v307 = vld [vmem:[%s1 + $0x14] sm:$0xf]
      %v308 = vld [vmem:[%s1 + $0x18] sm:$0xf]
      %v309 = vld [vmem:[%s1 + $0x1c] sm:$0xf]
      %v312 = vunpack.c.l.b16 %v280
      %v313 = vunpack.c.l.b16 %v281
      %v314 = vpack.c.b16 %v313, %v312
      %v323 = vunpack.c.l.b16 %v302
      %v324 = vunpack.c.l.b16 %v303
      %v325 = vunpack.c.l.b16 %v304
      %v326 = vunpack.c.l.b16 %v305
      %v327 = vunpack.c.l.b16 %v306
      %v328 = vunpack.c.l.b16 %v307
      %v329 = vunpack.c.l.b16 %v308
      %v330 = vunpack.c.l.b16 %v309
      %v331 = vpack.c.b16 %v324, %v323
      %v332 = vpack.c.b16 %v326, %v325
      %v333 = vpack.c.b16 %v328, %v327
      %v334 = vpack.c.b16 %v330, %v329
      %vm339 = vcmask 523264
      %v341 = vsel %vm339, %v314, 0
      %343 = vmatprep.subr.bf16.mxu0 0
      %344 = vmatpush1.bf16.msra.mxu0 %v331
      %345 = vmatprep.subr.bf16.mxu0 0
      %346 = vmatpush1.bf16.msra.mxu0 %v332
      %347 = vmatprep.subr.bf16.mxu0 0
      %348 = vmatpush1.bf16.msra.mxu0 %v333
      %349 = vmatprep.subr.bf16.mxu0 0
      %350 = vmatpush1.bf16.msra.mxu0 %v334
      %351 = vmatprep.subr.bf16.mxu0 0
      %352 = vmatpush1.bf16.msra.mxu0 0
      %353 = vmatprep.subr.bf16.mxu0 0
      %354 = vmatpush1.bf16.msra.mxu0 0
      %355 = vmatprep.subr.bf16.mxu0 0
      %356 = vmatpush1.bf16.msra.mxu0 0
      %357 = vmatprep.subr.bf16.mxu0 0
      %358 = vmatpush1.bf16.msra.mxu0 0
      %359 = vmatprep.subr.bf16.mxu0 0
      %360 = vmatpush1.bf16.msra.mxu0 0
      %361 = vmatprep.subr.bf16.mxu0 0
      %362 = vmatpush1.bf16.msra.mxu0 0
      %363 = vmatprep.subr.bf16.mxu0 0
      %364 = vmatpush1.bf16.msra.mxu0 0
      %365 = vmatprep.subr.bf16.mxu0 0
      %366 = vmatpush1.bf16.msra.mxu0 0
      %367 = vmatprep.subr.bf16.mxu0 0
      %368 = vmatpush1.bf16.msra.mxu0 0
      %369 = vmatprep.subr.bf16.mxu0 0
      %370 = vmatpush1.bf16.msra.mxu0 0
      %371 = vmatprep.subr.bf16.mxu0 0
      %372 = vmatpush1.bf16.msra.mxu0 0
      %373 = vmatprep.subr.bf16.mxu0 0
      %374 = vmatpush1.bf16.msra.mxu0 0
      %375 = vmatprep.mubr.bf16.mxu0 0
      %376 = vmatmul.mubr.bf16.gmra.mrb[0].mxu0 %v341
      %v377 = vpop.f32.mrb[0].mxu0
      %v378 = vadd.f32 0.0, %v377
      %v379 = vpop.f32.mrb[0].mxu0
      %v380 = vpop.f32.mrb[0].mxu0
      %v381 = vadd.f32 0.0, %v380
      %v382 = vpop.f32.mrb[0].mxu0
      %383 = vdwg.mxu0
      %s384 = scalar_lea.vmem %s1, 32
      %v385 = vld [vmem:[%s384] sm:$0xf]
      %v386 = vld [vmem:[%s384 + $0x4] sm:$0xf]
      %v387 = vld [vmem:[%s384 + $0x8] sm:$0xf]
      %v388 = vld [vmem:[%s384 + $0xc] sm:$0xf]
      %v389 = vld [vmem:[%s384 + $0x10] sm:$0xf]
      %v390 = vld [vmem:[%s384 + $0x14] sm:$0xf]
      %v391 = vld [vmem:[%s384 + $0x18] sm:$0xf]
      %v392 = vld [vmem:[%s384 + $0x1c] sm:$0xf]
      %s393 = scalar_lea.vmem %s1, 64
      %v394 = vld [vmem:[%s393] sm:$0xf]
      %v395 = vld [vmem:[%s393 + $0x4] sm:$0xf]
      %v396 = vld [vmem:[%s393 + $0x8] sm:$0xf]
      %v397 = vld [vmem:[%s393 + $0xc] sm:$0xf]
      %v398 = vld [vmem:[%s393 + $0x10] sm:$0xf]
      %v399 = vld [vmem:[%s393 + $0x14] sm:$0xf]
      %v400 = vld [vmem:[%s393 + $0x18] sm:$0xf]
      %v401 = vld [vmem:[%s393 + $0x1c] sm:$0xf]
      %v410 = vunpack.c.l.b16 %v394
      %v411 = vunpack.c.l.b16 %v395
      %v412 = vunpack.c.l.b16 %v396
      %v413 = vunpack.c.l.b16 %v397
      %v414 = vunpack.c.l.b16 %v398
      %v415 = vunpack.c.l.b16 %v399
      %v416 = vunpack.c.l.b16 %v400
      %v417 = vunpack.c.l.b16 %v401
      %v418 = vpack.c.b16 %v411, %v410
      %v419 = vpack.c.b16 %v413, %v412
      %v420 = vpack.c.b16 %v415, %v414
      %v421 = vpack.c.b16 %v417, %v416
      %426 = vmatprep.subr.bf16.mxu0 0
      %427 = vmatpush1.bf16.msra.mxu0 %v418
      %428 = vmatprep.subr.bf16.mxu0 0
      %429 = vmatpush1.bf16.msra.mxu0 %v419
      %430 = vmatprep.subr.bf16.mxu0 0
      %431 = vmatpush1.bf16.msra.mxu0 %v420
      %432 = vmatprep.subr.bf16.mxu0 0
      %433 = vmatpush1.bf16.msra.mxu0 %v421
      %434 = vmatprep.subr.bf16.mxu0 0
      %435 = vmatpush1.bf16.msra.mxu0 0
      %436 = vmatprep.subr.bf16.mxu0 0
      %437 = vmatpush1.bf16.msra.mxu0 0
      %438 = vmatprep.subr.bf16.mxu0 0
      %439 = vmatpush1.bf16.msra.mxu0 0
      %440 = vmatprep.subr.bf16.mxu0 0
      %441 = vmatpush1.bf16.msra.mxu0 0
      %442 = vmatprep.subr.bf16.mxu0 0
      %443 = vmatpush1.bf16.msra.mxu0 0
      %444 = vmatprep.subr.bf16.mxu0 0
      %445 = vmatpush1.bf16.msra.mxu0 0
      %446 = vmatprep.subr.bf16.mxu0 0
      %447 = vmatpush1.bf16.msra.mxu0 0
      %448 = vmatprep.subr.bf16.mxu0 0
      %449 = vmatpush1.bf16.msra.mxu0 0
      %450 = vmatprep.subr.bf16.mxu0 0
      %451 = vmatpush1.bf16.msra.mxu0 0
      %452 = vmatprep.subr.bf16.mxu0 0
      %453 = vmatpush1.bf16.msra.mxu0 0
      %454 = vmatprep.subr.bf16.mxu0 0
      %455 = vmatpush1.bf16.msra.mxu0 0
      %456 = vmatprep.subr.bf16.mxu0 0
      %457 = vmatpush1.bf16.msra.mxu0 0
      %458 = vmatprep.mubr.bf16.mxu0 0
      %459 = vmatmul.mubr.bf16.gmra.mrb[0].mxu0 %v341
      %v460 = vpop.f32.mrb[0].mxu0
      %v461 = vadd.f32 0.0, %v460
      %v462 = vpop.f32.mrb[0].mxu0
      %v463 = vpop.f32.mrb[0].mxu0
      %v464 = vadd.f32 0.0, %v463
      %v465 = vpop.f32.mrb[0].mxu0
      %466 = vdwg.mxu0
      %v467 = vld [vmem:[%s2] sm:$0xff]
      %v468 = vld [vmem:[%s2 + $0x8] sm:$0xff]
      %v477 = vunpack.c.l.b16 %v385
      %v478 = vunpack.c.l.b16 %v386
      %v479 = vunpack.c.l.b16 %v387
      %v480 = vunpack.c.l.b16 %v388
      %v481 = vunpack.c.l.b16 %v389
      %v482 = vunpack.c.l.b16 %v390
      %v483 = vunpack.c.l.b16 %v391
      %v484 = vunpack.c.l.b16 %v392
      %v485 = vpack.c.b16 %v478, %v477
      %v486 = vpack.c.b16 %v480, %v479
      %v487 = vpack.c.b16 %v482, %v481
      %v488 = vpack.c.b16 %v484, %v483
      %493 = vmatprep.subr.bf16.mxu0 0
      %494 = vmatpush1.bf16.msra.mxu0 %v485
      %495 = vmatprep.subr.bf16.mxu0 0
      %496 = vmatpush1.bf16.msra.mxu0 %v486
      %497 = vmatprep.subr.bf16.mxu0 0
      %498 = vmatpush1.bf16.msra.mxu0 %v487
      %499 = vmatprep.subr.bf16.mxu0 0
      %500 = vmatpush1.bf16.msra.mxu0 %v488
      %501 = vmatprep.subr.bf16.mxu0 0
      %502 = vmatpush1.bf16.msra.mxu0 0
      %503 = vmatprep.subr.bf16.mxu0 0
      %504 = vmatpush1.bf16.msra.mxu0 0
      %505 = vmatprep.subr.bf16.mxu0 0
      %506 = vmatpush1.bf16.msra.mxu0 0
      %507 = vmatprep.subr.bf16.mxu0 0
      %508 = vmatpush1.bf16.msra.mxu0 0
      %509 = vmatprep.subr.bf16.mxu0 0
      %510 = vmatpush1.bf16.msra.mxu0 0
      %511 = vmatprep.subr.bf16.mxu0 0
      %512 = vmatpush1.bf16.msra.mxu0 0
      %513 = vmatprep.subr.bf16.mxu0 0
      %514 = vmatpush1.bf16.msra.mxu0 0
      %515 = vmatprep.subr.bf16.mxu0 0
      %516 = vmatpush1.bf16.msra.mxu0 0
      %517 = vmatprep.subr.bf16.mxu0 0
      %518 = vmatpush1.bf16.msra.mxu0 0
      %519 = vmatprep.subr.bf16.mxu0 0
      %520 = vmatpush1.bf16.msra.mxu0 0
      %521 = vmatprep.subr.bf16.mxu0 0
      %522 = vmatpush1.bf16.msra.mxu0 0
      %523 = vmatprep.subr.bf16.mxu0 0
      %524 = vmatpush1.bf16.msra.mxu0 0
      %525 = vmatprep.mubr.bf16.mxu0 0
      %526 = vmatmul.mubr.bf16.gmra.mrb[0].mxu0 %v341
      %v527 = vpop.f32.mrb[0].mxu0
      %v528 = vadd.f32 %v467, %v527
      %v529 = vpop.f32.mrb[0].mxu0
      %v530 = vpop.f32.mrb[0].mxu0
      %v531 = vadd.f32 %v468, %v530
      %v532 = vpop.f32.mrb[0].mxu0
      %533 = vdwg.mxu0
      %vm534 = vcmask 130048
      %v536 = vsel %vm534, %v292, 0
      %v539 = vsel %vm534, %v293, 0
      %541 = vmatprep.subr.mxu0 0.0
      %542 = vmatpush1.msra.mxu0 %v378
      %543 = vmatprep.subr.mxu0 0.0
      %544 = vmatpush1.msra.mxu0 %v381
      %545 = vmatprep.subr.mxu0 0.0
      %546 = vmatpush1.msra.mxu0 0.0
      %547 = vmatprep.subr.mxu0 0.0
      %548 = vmatpush1.msra.mxu0 0.0
      %549 = vmatprep.subr.mxu0 0.0
      %550 = vmatpush1.msra.mxu0 0.0
      %551 = vmatprep.subr.mxu0 0.0
      %552 = vmatpush1.msra.mxu0 0.0
      %553 = vmatprep.subr.mxu0 0.0
      %554 = vmatpush1.msra.mxu0 0.0
      %555 = vmatprep.subr.mxu0 0.0
      %556 = vmatpush1.msra.mxu0 0.0
      %557 = vmatprep.subr.mxu0 0.0
      %558 = vmatpush1.msra.mxu0 0.0
      %559 = vmatprep.subr.mxu0 0.0
      %560 = vmatpush1.msra.mxu0 0.0
      %561 = vmatprep.subr.mxu0 0.0
      %562 = vmatpush1.msra.mxu0 0.0
      %563 = vmatprep.subr.mxu0 0.0
      %564 = vmatpush1.msra.mxu0 0.0
      %565 = vmatprep.subr.mxu0 0.0
      %566 = vmatpush1.msra.mxu0 0.0
      %567 = vmatprep.subr.mxu0 0.0
      %568 = vmatpush1.msra.mxu0 0.0
      %569 = vmatprep.subr.mxu0 0.0
      %570 = vmatpush1.msra.mxu0 0.0
      %571 = vmatprep.subr.mxu0 0.0
      %572 = vmatpush1.msra.mxu0 0.0
      %573 = vmatprep.subr.mxu0 0.0
      %574 = vmatpush1.msra.mxu0 0.0
      %575 = vmatprep.subr.mxu0 0.0
      %576 = vmatpush1.msra.mxu0 0.0
      %577 = vmatprep.subr.mxu0 0.0
      %578 = vmatpush1.msra.mxu0 0.0
      %579 = vmatprep.subr.mxu0 0.0
      %580 = vmatpush1.msra.mxu0 0.0
      %581 = vmatprep.subr.mxu0 0.0
      %582 = vmatpush1.msra.mxu0 0.0
      %583 = vmatprep.subr.mxu0 0.0
      %584 = vmatpush1.msra.mxu0 0.0
      %585 = vmatprep.subr.mxu0 0.0
      %586 = vmatpush1.msra.mxu0 0.0
      %587 = vmatprep.subr.mxu0 0.0
      %588 = vmatpush1.msra.mxu0 0.0
      %589 = vmatprep.subr.mxu0 0.0
      %590 = vmatpush1.msra.mxu0 0.0
      %591 = vmatprep.subr.mxu0 0.0
      %592 = vmatpush1.msra.mxu0 0.0
      %593 = vmatprep.subr.mxu0 0.0
      %594 = vmatpush1.msra.mxu0 0.0
      %595 = vmatprep.subr.mxu0 0.0
      %596 = vmatpush1.msra.mxu0 0.0
      %597 = vmatprep.subr.mxu0 0.0
      %598 = vmatpush1.msra.mxu0 0.0
      %599 = vmatprep.subr.mxu0 0.0
      %600 = vmatpush1.msra.mxu0 0.0
      %601 = vmatprep.subr.mxu0 0.0
      %602 = vmatpush1.msra.mxu0 0.0
      %603 = vmatprep.subr.mxu0 0.0
      %604 = vmatpush1.msra.mxu0 0.0
      %605 = vmatprep.mubr.f32.mxu0 0.0
      %606 = vmatmul.mubr.f32.gmra.mrb[0].mxu0 %v536
      %v607 = vpop.f32.mrb[0].mxu0
      %v608 = vadd.f32 0.0, %v607
      %v609 = vpop.f32.mrb[0].mxu0
      %610 = vmatprep.mubr.f32.mxu0 0.0
      %611 = vmatmul.mubr.f32.gmra.mrb[0].mxu0 %v539
      %v612 = vpop.f32.mrb[0].mxu0
      %v613 = vadd.f32 0.0, %v612
      %v614 = vpop.f32.mrb[0].mxu0
      %615 = vdwg.mxu0
      %v616 = vadd.f32 %v528, %v608
      %v617 = vadd.f32 %v531, %v613
      %v619 = vsel %vm534, %v300, 0
      %v622 = vsel %vm534, %v301, 0
      %624 = vmatprep.subr.mxu0 0.0
      %625 = vmatpush1.msra.mxu0 %v461
      %626 = vmatprep.subr.mxu0 0.0
      %627 = vmatpush1.msra.mxu0 %v464
      %628 = vmatprep.subr.mxu0 0.0
      %629 = vmatpush1.msra.mxu0 0.0
      %630 = vmatprep.subr.mxu0 0.0
      %631 = vmatpush1.msra.mxu0 0.0
      %632 = vmatprep.subr.mxu0 0.0
      %633 = vmatpush1.msra.mxu0 0.0
      %634 = vmatprep.subr.mxu0 0.0
      %635 = vmatpush1.msra.mxu0 0.0
      %636 = vmatprep.subr.mxu0 0.0
      %637 = vmatpush1.msra.mxu0 0.0
      %638 = vmatprep.subr.mxu0 0.0
      %639 = vmatpush1.msra.mxu0 0.0
      %640 = vmatprep.subr.mxu0 0.0
      %641 = vmatpush1.msra.mxu0 0.0
      %642 = vmatprep.subr.mxu0 0.0
      %643 = vmatpush1.msra.mxu0 0.0
      %644 = vmatprep.subr.mxu0 0.0
      %645 = vmatpush1.msra.mxu0 0.0
      %646 = vmatprep.subr.mxu0 0.0
      %647 = vmatpush1.msra.mxu0 0.0
      %648 = vmatprep.subr.mxu0 0.0
      %649 = vmatpush1.msra.mxu0 0.0
      %650 = vmatprep.subr.mxu0 0.0
      %651 = vmatpush1.msra.mxu0 0.0
      %652 = vmatprep.subr.mxu0 0.0
      %653 = vmatpush1.msra.mxu0 0.0
      %654 = vmatprep.subr.mxu0 0.0
      %655 = vmatpush1.msra.mxu0 0.0
      %656 = vmatprep.subr.mxu0 0.0
      %657 = vmatpush1.msra.mxu0 0.0
      %658 = vmatprep.subr.mxu0 0.0
      %659 = vmatpush1.msra.mxu0 0.0
      %660 = vmatprep.subr.mxu0 0.0
      %661 = vmatpush1.msra.mxu0 0.0
      %662 = vmatprep.subr.mxu0 0.0
      %663 = vmatpush1.msra.mxu0 0.0
      %664 = vmatprep.subr.mxu0 0.0
      %665 = vmatpush1.msra.mxu0 0.0
      %666 = vmatprep.subr.mxu0 0.0
      %667 = vmatpush1.msra.mxu0 0.0
      %668 = vmatprep.subr.mxu0 0.0
      %669 = vmatpush1.msra.mxu0 0.0
      %670 = vmatprep.subr.mxu0 0.0
      %671 = vmatpush1.msra.mxu0 0.0
      %672 = vmatprep.subr.mxu0 0.0
      %673 = vmatpush1.msra.mxu0 0.0
      %674 = vmatprep.subr.mxu0 0.0
      %675 = vmatpush1.msra.mxu0 0.0
      %676 = vmatprep.subr.mxu0 0.0
      %677 = vmatpush1.msra.mxu0 0.0
      %678 = vmatprep.subr.mxu0 0.0
      %679 = vmatpush1.msra.mxu0 0.0
      %680 = vmatprep.subr.mxu0 0.0
      %681 = vmatpush1.msra.mxu0 0.0
      %682 = vmatprep.subr.mxu0 0.0
      %683 = vmatpush1.msra.mxu0 0.0
      %684 = vmatprep.subr.mxu0 0.0
      %685 = vmatpush1.msra.mxu0 0.0
      %686 = vmatprep.subr.mxu0 0.0
      %687 = vmatpush1.msra.mxu0 0.0
      %688 = vmatprep.mubr.f32.mxu0 0.0
      %689 = vmatmul.mubr.f32.gmra.mrb[0].mxu0 %v619
      %v690 = vpop.f32.mrb[0].mxu0
      %v691 = vadd.f32 0.0, %v690
      %v692 = vpop.f32.mrb[0].mxu0
      %693 = vmatprep.mubr.f32.mxu0 0.0
      %694 = vmatmul.mubr.f32.gmra.mrb[0].mxu0 %v622
      %v695 = vpop.f32.mrb[0].mxu0
      %v696 = vadd.f32 0.0, %v695
      %v697 = vpop.f32.mrb[0].mxu0
      %698 = vdwg.mxu0
      %v699 = vadd.f32 %v616, %v691
      %v700 = vadd.f32 %v617, %v696
      %vm701 = vcmp.ge.f32.partialorder %v699, 0.0
      %vm702 = vcmp.ge.f32.partialorder %v700, 0.0
      %v703 = vmul.f32 %v699, 0.2
      %v704 = vmul.f32 %v700, 0.2
      %v705 = vsel %vm701, %v699, %v703
      %v706 = vsel %vm702, %v700, %v704
      %v707 = vpack.c.bf16 %v706, %v705
      %v708 = vld [vmem:[%s3] sm:$0xf]
      %v709 = vld [vmem:[%s3 + $0x4] sm:$0xf]
      %v710 = vld [vmem:[%s3 + $0x8] sm:$0xf]
      %v711 = vld [vmem:[%s3 + $0xc] sm:$0xf]
      %v712 = vld [vmem:[%s3 + $0x10] sm:$0xf]
      %v713 = vld [vmem:[%s3 + $0x14] sm:$0xf]
      %v714 = vld [vmem:[%s3 + $0x18] sm:$0xf]
      %v715 = vld [vmem:[%s3 + $0x1c] sm:$0xf]
      %v716 = vld [vmem:[%s3 + $0x20] sm:$0xf]
      %v717 = vld [vmem:[%s3 + $0x24] sm:$0xf]
      %v718 = vld [vmem:[%s3 + $0x28] sm:$0xf]
      %v719 = vld [vmem:[%s3 + $0x2c] sm:$0xf]
      %v720 = vld [vmem:[%s3 + $0x30] sm:$0xf]
      %v721 = vld [vmem:[%s3 + $0x34] sm:$0xf]
      %v722 = vld [vmem:[%s3 + $0x38] sm:$0xf]
      %v723 = vld [vmem:[%s3 + $0x3c] sm:$0xf]
      %v740 = vunpack.c.l.b16 %v708
      %v741 = vunpack.c.l.b16 %v709
      %v742 = vunpack.c.l.b16 %v710
      %v743 = vunpack.c.l.b16 %v711
      %v744 = vunpack.c.l.b16 %v712
      %v745 = vunpack.c.l.b16 %v713
      %v746 = vunpack.c.l.b16 %v714
      %v747 = vunpack.c.l.b16 %v715
      %v748 = vunpack.c.l.b16 %v716
      %v749 = vunpack.c.l.b16 %v717
      %v750 = vunpack.c.l.b16 %v718
      %v751 = vunpack.c.l.b16 %v719
      %v752 = vunpack.c.l.b16 %v720
      %v753 = vunpack.c.l.b16 %v721
      %v754 = vunpack.c.l.b16 %v722
      %v755 = vunpack.c.l.b16 %v723
      %v756 = vpack.c.b16 %v741, %v740
      %v757 = vpack.c.b16 %v743, %v742
      %v758 = vpack.c.b16 %v745, %v744
      %v759 = vpack.c.b16 %v747, %v746
      %v760 = vpack.c.b16 %v749, %v748
      %v761 = vpack.c.b16 %v751, %v750
      %v762 = vpack.c.b16 %v753, %v752
      %v763 = vpack.c.b16 %v755, %v754
      %772 = vmatprep.subr.bf16.mxu0 0
      %773 = vmatpush1.bf16.msra.mxu0 %v756
      %774 = vmatprep.subr.bf16.mxu0 0
      %775 = vmatpush1.bf16.msra.mxu0 %v757
      %776 = vmatprep.subr.bf16.mxu0 0
      %777 = vmatpush1.bf16.msra.mxu0 %v758
      %778 = vmatprep.subr.bf16.mxu0 0
      %779 = vmatpush1.bf16.msra.mxu0 %v759
      %780 = vmatprep.subr.bf16.mxu0 0
      %781 = vmatpush1.bf16.msra.mxu0 %v760
      %782 = vmatprep.subr.bf16.mxu0 0
      %783 = vmatpush1.bf16.msra.mxu0 %v761
      %784 = vmatprep.subr.bf16.mxu0 0
      %785 = vmatpush1.bf16.msra.mxu0 %v762
      %786 = vmatprep.subr.bf16.mxu0 0
      %787 = vmatpush1.bf16.msra.mxu0 %v763
      %788 = vmatprep.subr.bf16.mxu0 0
      %789 = vmatpush1.bf16.msra.mxu0 0
      %790 = vmatprep.subr.bf16.mxu0 0
      %791 = vmatpush1.bf16.msra.mxu0 0
      %792 = vmatprep.subr.bf16.mxu0 0
      %793 = vmatpush1.bf16.msra.mxu0 0
      %794 = vmatprep.subr.bf16.mxu0 0
      %795 = vmatpush1.bf16.msra.mxu0 0
      %796 = vmatprep.subr.bf16.mxu0 0
      %797 = vmatpush1.bf16.msra.mxu0 0
      %798 = vmatprep.subr.bf16.mxu0 0
      %799 = vmatpush1.bf16.msra.mxu0 0
      %800 = vmatprep.subr.bf16.mxu0 0
      %801 = vmatpush1.bf16.msra.mxu0 0
      %802 = vmatprep.subr.bf16.mxu0 0
      %803 = vmatpush1.bf16.msra.mxu0 0
      %804 = vmatprep.mubr.bf16.mxu0 0
      %805 = vmatmul.mubr.bf16.gmra.mrb[0].mxu0 %v707
      %v806 = vpop.f32.mrb[0].mxu0
      %v807 = vadd.f32 0.0, %v806
      %v808 = vpop.f32.mrb[0].mxu0
      %v809 = vpop.f32.mrb[0].mxu0
      %v810 = vadd.f32 0.0, %v809
      %v811 = vpop.f32.mrb[0].mxu0
      %812 = vdwg.mxu0
      %s813 = scalar_lea.vmem %s3, 64
      %v814 = vld [vmem:[%s813] sm:$0xf]
      %v815 = vld [vmem:[%s813 + $0x4] sm:$0xf]
      %v816 = vld [vmem:[%s813 + $0x8] sm:$0xf]
      %v817 = vld [vmem:[%s813 + $0xc] sm:$0xf]
      %v818 = vld [vmem:[%s813 + $0x10] sm:$0xf]
      %v819 = vld [vmem:[%s813 + $0x14] sm:$0xf]
      %v820 = vld [vmem:[%s813 + $0x18] sm:$0xf]
      %v821 = vld [vmem:[%s813 + $0x1c] sm:$0xf]
      %v822 = vld [vmem:[%s813 + $0x20] sm:$0xf]
      %v823 = vld [vmem:[%s813 + $0x24] sm:$0xf]
      %v824 = vld [vmem:[%s813 + $0x28] sm:$0xf]
      %v825 = vld [vmem:[%s813 + $0x2c] sm:$0xf]
      %v826 = vld [vmem:[%s813 + $0x30] sm:$0xf]
      %v827 = vld [vmem:[%s813 + $0x34] sm:$0xf]
      %v828 = vld [vmem:[%s813 + $0x38] sm:$0xf]
      %v829 = vld [vmem:[%s813 + $0x3c] sm:$0xf]
      %s830 = scalar_lea.vmem %s3, 128
      %v831 = vld [vmem:[%s830] sm:$0xf]
      %v832 = vld [vmem:[%s830 + $0x4] sm:$0xf]
      %v833 = vld [vmem:[%s830 + $0x8] sm:$0xf]
      %v834 = vld [vmem:[%s830 + $0xc] sm:$0xf]
      %v835 = vld [vmem:[%s830 + $0x10] sm:$0xf]
      %v836 = vld [vmem:[%s830 + $0x14] sm:$0xf]
      %v837 = vld [vmem:[%s830 + $0x18] sm:$0xf]
      %v838 = vld [vmem:[%s830 + $0x1c] sm:$0xf]
      %v839 = vld [vmem:[%s830 + $0x20] sm:$0xf]
      %v840 = vld [vmem:[%s830 + $0x24] sm:$0xf]
      %v841 = vld [vmem:[%s830 + $0x28] sm:$0xf]
      %v842 = vld [vmem:[%s830 + $0x2c] sm:$0xf]
      %v843 = vld [vmem:[%s830 + $0x30] sm:$0xf]
      %v844 = vld [vmem:[%s830 + $0x34] sm:$0xf]
      %v845 = vld [vmem:[%s830 + $0x38] sm:$0xf]
      %v846 = vld [vmem:[%s830 + $0x3c] sm:$0xf]
      %v863 = vunpack.c.l.b16 %v831
      %v864 = vunpack.c.l.b16 %v832
      %v865 = vunpack.c.l.b16 %v833
      %v866 = vunpack.c.l.b16 %v834
      %v867 = vunpack.c.l.b16 %v835
      %v868 = vunpack.c.l.b16 %v836
      %v869 = vunpack.c.l.b16 %v837
      %v870 = vunpack.c.l.b16 %v838
      %v871 = vunpack.c.l.b16 %v839
      %v872 = vunpack.c.l.b16 %v840
      %v873 = vunpack.c.l.b16 %v841
      %v874 = vunpack.c.l.b16 %v842
      %v875 = vunpack.c.l.b16 %v843
      %v876 = vunpack.c.l.b16 %v844
      %v877 = vunpack.c.l.b16 %v845
      %v878 = vunpack.c.l.b16 %v846
      %v879 = vpack.c.b16 %v864, %v863
      %v880 = vpack.c.b16 %v866, %v865
      %v881 = vpack.c.b16 %v868, %v867
      %v882 = vpack.c.b16 %v870, %v869
      %v883 = vpack.c.b16 %v872, %v871
      %v884 = vpack.c.b16 %v874, %v873
      %v885 = vpack.c.b16 %v876, %v875
      %v886 = vpack.c.b16 %v878, %v877
      %895 = vmatprep.subr.bf16.mxu0 0
      %896 = vmatpush1.bf16.msra.mxu0 %v879
      %897 = vmatprep.subr.bf16.mxu0 0
      %898 = vmatpush1.bf16.msra.mxu0 %v880
      %899 = vmatprep.subr.bf16.mxu0 0
      %900 = vmatpush1.bf16.msra.mxu0 %v881
      %901 = vmatprep.subr.bf16.mxu0 0
      %902 = vmatpush1.bf16.msra.mxu0 %v882
      %903 = vmatprep.subr.bf16.mxu0 0
      %904 = vmatpush1.bf16.msra.mxu0 %v883
      %905 = vmatprep.subr.bf16.mxu0 0
      %906 = vmatpush1.bf16.msra.mxu0 %v884
      %907 = vmatprep.subr.bf16.mxu0 0
      %908 = vmatpush1.bf16.msra.mxu0 %v885
      %909 = vmatprep.subr.bf16.mxu0 0
      %910 = vmatpush1.bf16.msra.mxu0 %v886
      %911 = vmatprep.subr.bf16.mxu0 0
      %912 = vmatpush1.bf16.msra.mxu0 0
      %913 = vmatprep.subr.bf16.mxu0 0
      %914 = vmatpush1.bf16.msra.mxu0 0
      %915 = vmatprep.subr.bf16.mxu0 0
      %916 = vmatpush1.bf16.msra.mxu0 0
      %917 = vmatprep.subr.bf16.mxu0 0
      %918 = vmatpush1.bf16.msra.mxu0 0
      %919 = vmatprep.subr.bf16.mxu0 0
      %920 = vmatpush1.bf16.msra.mxu0 0
      %921 = vmatprep.subr.bf16.mxu0 0
      %922 = vmatpush1.bf16.msra.mxu0 0
      %923 = vmatprep.subr.bf16.mxu0 0
      %924 = vmatpush1.bf16.msra.mxu0 0
      %925 = vmatprep.subr.bf16.mxu0 0
      %926 = vmatpush1.bf16.msra.mxu0 0
      %927 = vmatprep.mubr.bf16.mxu0 0
      %928 = vmatmul.mubr.bf16.gmra.mrb[0].mxu0 %v707
      %v929 = vpop.f32.mrb[0].mxu0
      %v930 = vadd.f32 0.0, %v929
      %v931 = vpop.f32.mrb[0].mxu0
      %v932 = vpop.f32.mrb[0].mxu0
      %v933 = vadd.f32 0.0, %v932
      %v934 = vpop.f32.mrb[0].mxu0
      %935 = vdwg.mxu0
      %v936 = vld [vmem:[%s4] sm:$0xff]
      %v937 = vld [vmem:[%s4 + $0x8] sm:$0xff]
      %v954 = vunpack.c.l.b16 %v814
      %v955 = vunpack.c.l.b16 %v815
      %v956 = vunpack.c.l.b16 %v816
      %v957 = vunpack.c.l.b16 %v817
      %v958 = vunpack.c.l.b16 %v818
      %v959 = vunpack.c.l.b16 %v819
      %v960 = vunpack.c.l.b16 %v820
      %v961 = vunpack.c.l.b16 %v821
      %v962 = vunpack.c.l.b16 %v822
      %v963 = vunpack.c.l.b16 %v823
      %v964 = vunpack.c.l.b16 %v824
      %v965 = vunpack.c.l.b16 %v825
      %v966 = vunpack.c.l.b16 %v826
      %v967 = vunpack.c.l.b16 %v827
      %v968 = vunpack.c.l.b16 %v828
      %v969 = vunpack.c.l.b16 %v829
      %v970 = vpack.c.b16 %v955, %v954
      %v971 = vpack.c.b16 %v957, %v956
      %v972 = vpack.c.b16 %v959, %v958
      %v973 = vpack.c.b16 %v961, %v960
      %v974 = vpack.c.b16 %v963, %v962
      %v975 = vpack.c.b16 %v965, %v964
      %v976 = vpack.c.b16 %v967, %v966
      %v977 = vpack.c.b16 %v969, %v968
      %986 = vmatprep.subr.bf16.mxu0 0
      %987 = vmatpush1.bf16.msra.mxu0 %v970
      %988 = vmatprep.subr.bf16.mxu0 0
      %989 = vmatpush1.bf16.msra.mxu0 %v971
      %990 = vmatprep.subr.bf16.mxu0 0
      %991 = vmatpush1.bf16.msra.mxu0 %v972
      %992 = vmatprep.subr.bf16.mxu0 0
      %993 = vmatpush1.bf16.msra.mxu0 %v973
      %994 = vmatprep.subr.bf16.mxu0 0
      %995 = vmatpush1.bf16.msra.mxu0 %v974
      %996 = vmatprep.subr.bf16.mxu0 0
      %997 = vmatpush1.bf16.msra.mxu0 %v975
      %998 = vmatprep.subr.bf16.mxu0 0
      %999 = vmatpush1.bf16.msra.mxu0 %v976
      %1000 = vmatprep.subr.bf16.mxu0 0
      %1001 = vmatpush1.bf16.msra.mxu0 %v977
      %1002 = vmatprep.subr.bf16.mxu0 0
      %1003 = vmatpush1.bf16.msra.mxu0 0
      %1004 = vmatprep.subr.bf16.mxu0 0
      %1005 = vmatpush1.bf16.msra.mxu0 0
      %1006 = vmatprep.subr.bf16.mxu0 0
      %1007 = vmatpush1.bf16.msra.mxu0 0
      %1008 = vmatprep.subr.bf16.mxu0 0
      %1009 = vmatpush1.bf16.msra.mxu0 0
      %1010 = vmatprep.subr.bf16.mxu0 0
      %1011 = vmatpush1.bf16.msra.mxu0 0
      %1012 = vmatprep.subr.bf16.mxu0 0
      %1013 = vmatpush1.bf16.msra.mxu0 0
      %1014 = vmatprep.subr.bf16.mxu0 0
      %1015 = vmatpush1.bf16.msra.mxu0 0
      %1016 = vmatprep.subr.bf16.mxu0 0
      %1017 = vmatpush1.bf16.msra.mxu0 0
      %1018 = vmatprep.mubr.bf16.mxu0 0
      %1019 = vmatmul.mubr.bf16.gmra.mrb[0].mxu0 %v707
      %v1020 = vpop.f32.mrb[0].mxu0
      %v1021 = vadd.f32 %v936, %v1020
      %v1022 = vpop.f32.mrb[0].mxu0
      %v1023 = vpop.f32.mrb[0].mxu0
      %v1024 = vadd.f32 %v937, %v1023
      %v1025 = vpop.f32.mrb[0].mxu0
      %1026 = vdwg.mxu0
      %1027 = vmatprep.subr.mxu0 0.0
      %1028 = vmatpush1.msra.mxu0 %v807
      %1029 = vmatprep.subr.mxu0 0.0
      %1030 = vmatpush1.msra.mxu0 %v810
      %1031 = vmatprep.subr.mxu0 0.0
      %1032 = vmatpush1.msra.mxu0 0.0
      %1033 = vmatprep.subr.mxu0 0.0
      %1034 = vmatpush1.msra.mxu0 0.0
      %1035 = vmatprep.subr.mxu0 0.0
      %1036 = vmatpush1.msra.mxu0 0.0
      %1037 = vmatprep.subr.mxu0 0.0
      %1038 = vmatpush1.msra.mxu0 0.0
      %1039 = vmatprep.subr.mxu0 0.0
      %1040 = vmatpush1.msra.mxu0 0.0
      %1041 = vmatprep.subr.mxu0 0.0
      %1042 = vmatpush1.msra.mxu0 0.0
      %1043 = vmatprep.subr.mxu0 0.0
      %1044 = vmatpush1.msra.mxu0 0.0
      %1045 = vmatprep.subr.mxu0 0.0
      %1046 = vmatpush1.msra.mxu0 0.0
      %1047 = vmatprep.subr.mxu0 0.0
      %1048 = vmatpush1.msra.mxu0 0.0
      %1049 = vmatprep.subr.mxu0 0.0
      %1050 = vmatpush1.msra.mxu0 0.0
      %1051 = vmatprep.subr.mxu0 0.0
      %1052 = vmatpush1.msra.mxu0 0.0
      %1053 = vmatprep.subr.mxu0 0.0
      %1054 = vmatpush1.msra.mxu0 0.0
      %1055 = vmatprep.subr.mxu0 0.0
      %1056 = vmatpush1.msra.mxu0 0.0
      %1057 = vmatprep.subr.mxu0 0.0
      %1058 = vmatpush1.msra.mxu0 0.0
      %1059 = vmatprep.subr.mxu0 0.0
      %1060 = vmatpush1.msra.mxu0 0.0
      %1061 = vmatprep.subr.mxu0 0.0
      %1062 = vmatpush1.msra.mxu0 0.0
      %1063 = vmatprep.subr.mxu0 0.0
      %1064 = vmatpush1.msra.mxu0 0.0
      %1065 = vmatprep.subr.mxu0 0.0
      %1066 = vmatpush1.msra.mxu0 0.0
      %1067 = vmatprep.subr.mxu0 0.0
      %1068 = vmatpush1.msra.mxu0 0.0
      %1069 = vmatprep.subr.mxu0 0.0
      %1070 = vmatpush1.msra.mxu0 0.0
      %1071 = vmatprep.subr.mxu0 0.0
      %1072 = vmatpush1.msra.mxu0 0.0
      %1073 = vmatprep.subr.mxu0 0.0
      %1074 = vmatpush1.msra.mxu0 0.0
      %1075 = vmatprep.subr.mxu0 0.0
      %1076 = vmatpush1.msra.mxu0 0.0
      %1077 = vmatprep.subr.mxu0 0.0
      %1078 = vmatpush1.msra.mxu0 0.0
      %1079 = vmatprep.subr.mxu0 0.0
      %1080 = vmatpush1.msra.mxu0 0.0
      %1081 = vmatprep.subr.mxu0 0.0
      %1082 = vmatpush1.msra.mxu0 0.0
      %1083 = vmatprep.subr.mxu0 0.0
      %1084 = vmatpush1.msra.mxu0 0.0
      %1085 = vmatprep.subr.mxu0 0.0
      %1086 = vmatpush1.msra.mxu0 0.0
      %1087 = vmatprep.subr.mxu0 0.0
      %1088 = vmatpush1.msra.mxu0 0.0
      %1089 = vmatprep.subr.mxu0 0.0
      %1090 = vmatpush1.msra.mxu0 0.0
      %1091 = vmatprep.mubr.f32.mxu0 0.0
      %1092 = vmatmul.mubr.f32.gmra.mrb[0].mxu0 %v536
      %v1093 = vpop.f32.mrb[0].mxu0
      %v1094 = vadd.f32 0.0, %v1093
      %v1095 = vpop.f32.mrb[0].mxu0
      %1096 = vmatprep.mubr.f32.mxu0 0.0
      %1097 = vmatmul.mubr.f32.gmra.mrb[0].mxu0 %v539
      %v1098 = vpop.f32.mrb[0].mxu0
      %v1099 = vadd.f32 0.0, %v1098
      %v1100 = vpop.f32.mrb[0].mxu0
      %1101 = vdwg.mxu0
      %v1102 = vadd.f32 %v1021, %v1094
      %v1103 = vadd.f32 %v1024, %v1099
      %1104 = vmatprep.subr.mxu0 0.0
      %1105 = vmatpush1.msra.mxu0 %v930
      %1106 = vmatprep.subr.mxu0 0.0
      %1107 = vmatpush1.msra.mxu0 %v933
      %1108 = vmatprep.subr.mxu0 0.0
      %1109 = vmatpush1.msra.mxu0 0.0
      %1110 = vmatprep.subr.mxu0 0.0
      %1111 = vmatpush1.msra.mxu0 0.0
      %1112 = vmatprep.subr.mxu0 0.0
      %1113 = vmatpush1.msra.mxu0 0.0
      %1114 = vmatprep.subr.mxu0 0.0
      %1115 = vmatpush1.msra.mxu0 0.0
      %1116 = vmatprep.subr.mxu0 0.0
      %1117 = vmatpush1.msra.mxu0 0.0
      %1118 = vmatprep.subr.mxu0 0.0
      %1119 = vmatpush1.msra.mxu0 0.0
      %1120 = vmatprep.subr.mxu0 0.0
      %1121 = vmatpush1.msra.mxu0 0.0
      %1122 = vmatprep.subr.mxu0 0.0
      %1123 = vmatpush1.msra.mxu0 0.0
      %1124 = vmatprep.subr.mxu0 0.0
      %1125 = vmatpush1.msra.mxu0 0.0
      %1126 = vmatprep.subr.mxu0 0.0
      %1127 = vmatpush1.msra.mxu0 0.0
      %1128 = vmatprep.subr.mxu0 0.0
      %1129 = vmatpush1.msra.mxu0 0.0
      %1130 = vmatprep.subr.mxu0 0.0
      %1131 = vmatpush1.msra.mxu0 0.0
      %1132 = vmatprep.subr.mxu0 0.0
      %1133 = vmatpush1.msra.mxu0 0.0
      %1134 = vmatprep.subr.mxu0 0.0
      %1135 = vmatpush1.msra.mxu0 0.0
      %1136 = vmatprep.subr.mxu0 0.0
      %1137 = vmatpush1.msra.mxu0 0.0
      %1138 = vmatprep.subr.mxu0 0.0
      %1139 = vmatpush1.msra.mxu0 0.0
      %1140 = vmatprep.subr.mxu0 0.0
      %1141 = vmatpush1.msra.mxu0 0.0
      %1142 = vmatprep.subr.mxu0 0.0
      %1143 = vmatpush1.msra.mxu0 0.0
      %1144 = vmatprep.subr.mxu0 0.0
      %1145 = vmatpush1.msra.mxu0 0.0
      %1146 = vmatprep.subr.mxu0 0.0
      %1147 = vmatpush1.msra.mxu0 0.0
      %1148 = vmatprep.subr.mxu0 0.0
      %1149 = vmatpush1.msra.mxu0 0.0
      %1150 = vmatprep.subr.mxu0 0.0
      %1151 = vmatpush1.msra.mxu0 0.0
      %1152 = vmatprep.subr.mxu0 0.0
      %1153 = vmatpush1.msra.mxu0 0.0
      %1154 = vmatprep.subr.mxu0 0.0
      %1155 = vmatpush1.msra.mxu0 0.0
      %1156 = vmatprep.subr.mxu0 0.0
      %1157 = vmatpush1.msra.mxu0 0.0
      %1158 = vmatprep.subr.mxu0 0.0
      %1159 = vmatpush1.msra.mxu0 0.0
      %1160 = vmatprep.subr.mxu0 0.0
      %1161 = vmatpush1.msra.mxu0 0.0
      %1162 = vmatprep.subr.mxu0 0.0
      %1163 = vmatpush1.msra.mxu0 0.0
      %1164 = vmatprep.subr.mxu0 0.0
      %1165 = vmatpush1.msra.mxu0 0.0
      %1166 = vmatprep.subr.mxu0 0.0
      %1167 = vmatpush1.msra.mxu0 0.0
      %1168 = vmatprep.mubr.f32.mxu0 0.0
      %1169 = vmatmul.mubr.f32.gmra.mrb[0].mxu0 %v619
      %v1170 = vpop.f32.mrb[0].mxu0
      %v1171 = vadd.f32 0.0, %v1170
      %v1172 = vpop.f32.mrb[0].mxu0
      %1173 = vmatprep.mubr.f32.mxu0 0.0
      %1174 = vmatmul.mubr.f32.gmra.mrb[0].mxu0 %v622
      %v1175 = vpop.f32.mrb[0].mxu0
      %v1176 = vadd.f32 0.0, %v1175
      %v1177 = vpop.f32.mrb[0].mxu0
      %1178 = vdwg.mxu0
      %v1179 = vadd.f32 %v1102, %v1171
      %v1180 = vadd.f32 %v1103, %v1176
      %vm1181 = vcmp.ge.f32.partialorder %v1179, 0.0
      %vm1182 = vcmp.ge.f32.partialorder %v1180, 0.0
      %v1183 = vmul.f32 %v1179, 0.2
      %v1184 = vmul.f32 %v1180, 0.2
      %v1185 = vsel %vm1181, %v1179, %v1183
      %v1186 = vsel %vm1182, %v1180, %v1184
      %v1187 = vld [vmem:[%s5] sm:$0xf]
      %v1188 = vld [vmem:[%s5 + $0x4] sm:$0xf]
      %v1189 = vld [vmem:[%s5 + $0x8] sm:$0xf]
      %v1190 = vld [vmem:[%s5 + $0xc] sm:$0xf]
      %v1191 = vld [vmem:[%s5 + $0x10] sm:$0xf]
      %v1192 = vld [vmem:[%s5 + $0x14] sm:$0xf]
      %v1193 = vld [vmem:[%s5 + $0x18] sm:$0xf]
      %v1194 = vld [vmem:[%s5 + $0x1c] sm:$0xf]
      %v1195 = vld [vmem:[%s6] sm:$0x1]
      %v1197 = vlaneseq
      %v1198 = vshrl.u32 %v1197, 7
      %v1199 = vsub.s32 0, %v1198
      %v1200 = vrot.slane %v1195, %v1199
      %v1210 = vunpack.c.l.b16 %v1187
      %v1211 = vunpack.c.l.b16 %v1188
      %v1212 = vunpack.c.l.b16 %v1189
      %v1213 = vunpack.c.l.b16 %v1190
      %v1214 = vunpack.c.l.b16 %v1191
      %v1215 = vunpack.c.l.b16 %v1192
      %v1216 = vunpack.c.l.b16 %v1193
      %v1217 = vunpack.c.l.b16 %v1194
      %v1218 = vpack.c.b16 %v1211, %v1210
      %v1219 = vpack.c.b16 %v1213, %v1212
      %v1220 = vpack.c.b16 %v1215, %v1214
      %v1221 = vpack.c.b16 %v1217, %v1216
      %1226 = vmatprep.subr.bf16.mxu0 0
      %1227 = vmatpush1.bf16.msra.mxu0 %v1218
      %1228 = vmatprep.subr.bf16.mxu0 0
      %1229 = vmatpush1.bf16.msra.mxu0 %v1219
      %1230 = vmatprep.subr.bf16.mxu0 0
      %1231 = vmatpush1.bf16.msra.mxu0 %v1220
      %1232 = vmatprep.subr.bf16.mxu0 0
      %1233 = vmatpush1.bf16.msra.mxu0 %v1221
      %1234 = vmatprep.subr.bf16.mxu0 0
      %1235 = vmatpush1.bf16.msra.mxu0 0
      %1236 = vmatprep.subr.bf16.mxu0 0
      %1237 = vmatpush1.bf16.msra.mxu0 0
      %1238 = vmatprep.subr.bf16.mxu0 0
      %1239 = vmatpush1.bf16.msra.mxu0 0
      %1240 = vmatprep.subr.bf16.mxu0 0
      %1241 = vmatpush1.bf16.msra.mxu0 0
      %1242 = vmatprep.subr.bf16.mxu0 0
      %1243 = vmatpush1.bf16.msra.mxu0 0
      %1244 = vmatprep.subr.bf16.mxu0 0
      %1245 = vmatpush1.bf16.msra.mxu0 0
      %1246 = vmatprep.subr.bf16.mxu0 0
      %1247 = vmatpush1.bf16.msra.mxu0 0
      %1248 = vmatprep.subr.bf16.mxu0 0
      %1249 = vmatpush1.bf16.msra.mxu0 0
      %1250 = vmatprep.subr.bf16.mxu0 0
      %1251 = vmatpush1.bf16.msra.mxu0 0
      %1252 = vmatprep.subr.bf16.mxu0 0
      %1253 = vmatpush1.bf16.msra.mxu0 0
      %1254 = vmatprep.subr.bf16.mxu0 0
      %1255 = vmatpush1.bf16.msra.mxu0 0
      %1256 = vmatprep.subr.bf16.mxu0 0
      %1257 = vmatpush1.bf16.msra.mxu0 0
      %1258 = vmatprep.mubr.bf16.mxu0 0
      %1259 = vmatmul.mubr.bf16.gmra.mrb[0].mxu0 %v341
      %v1260 = vpop.f32.mrb[0].mxu0
      %v1261 = vadd.f32 %v1200, %v1260
      %v1262 = vpop.f32.mrb[0].mxu0
      %v1263 = vpop.f32.mrb[0].mxu0
      %v1264 = vadd.f32 %v1200, %v1263
      %v1265 = vpop.f32.mrb[0].mxu0
      %1266 = vdwg.mxu0
      %v1267 = vadd.f32 %v1185, %v1261
      %v1268 = vadd.f32 %v1186, %v1264
      %v1269 = vmul.f32 %v1267, 0.70710677
      %v1270 = vmul.f32 %v1268, 0.70710677
      %1271 = vst [vmem:[%s278] sm:$0xff] %v1269
      %1272 = vst [vmem:[%s278 + $0x8] sm:$0xff] %v1270
      %p1273 = scmp.lt.s32.totalorder %s18, 1
      %s1274 = scalar_select %p1273, %s18, 1
      %s1275 = smul.addr %s1274, 2
      %s1276 = smul.addr %s1275, 8
      %s1277 = scalar_lea.vmem %s7, %s1276
      // Predicated region
      $region49: #{residual_coord_conv.1} parent=47 // pred_check
        %p1278 = pneg %p188
      $region50: #{residual_coord_conv.1} parent=47 // pred_check_branch
        %1280 = sbr.rel (%p1278) target = $region52
      $region51: #{residual_coord_conv.1} parent=47 // pred_region
        _
      $region52: #{residual_coord_conv.1} parent=47 // pred_fallthru
        _
    $region48: #{residual_coord_conv.1} parent=5 // pred_fallthru
      _
    %p1281 = scmp.le.s32.totalorder 2, %s13
    // Predicated region
    $region53: #{residual_coord_conv.1} parent=5 // pred_check
      %p1282 = pneg %p1281
    $region54: #{residual_coord_conv.1} parent=5 // pred_check_branch
      %1284 = sbr.rel (%p1282) target = $region56
    $region55: #{residual_coord_conv.1} parent=5 // pred_region
      %s1285 = ssub.s32 %s13, 2
      // Predicated region
      $region57: #{residual_coord_conv.1} parent=55 // pred_check
        %p1286 = pneg %p194
      $region58: #{residual_coord_conv.1} parent=55 // pred_check_branch
        %1288 = sbr.rel (%p1286) target = $region60
      $region59: #{residual_coord_conv.1} parent=55 // pred_region
        %p1289 = scmp.lt.s32.totalorder %s19, 1
        %s1290 = scalar_select %p1289, %s19, 1
        %s1291 = smul.addr %s1290, 2
        %s1292 = smul.addr %s1291, 8
        %s1293 = scalar_lea.vmem %s7, %s1292
      $region60: #{residual_coord_conv.1} parent=55 // pred_fallthru
        _
    $region56: #{residual_coord_conv.1} parent=5 // pred_fallthru
      _
  $region6: #{residual_coord_conv.1} parent=0 // loop_footer
    %s17 = sadd.s32 1, %s13
  $region7: #{residual_coord_conv.1} parent=0 // loop_footer_branch
    %12 = sbr.rel target = $region3
  $region8: #{residual_coord_conv.1} parent=0 // loop_exit
    _

</llo_original>
